<compile_context>
chip_gen: v5e
topology: v5e:2x2
jax: 0.10.0
libtpu: 0.0.40
codegen_flags: <defaults>
</compile_context>

<pallas_src>
import jax
import jax.numpy as jnp
import numpy as np
from jax.experimental import pallas as pl
from jax.experimental.pallas import tpu as pltpu

_NCORES = 2  # leading "parallel" grid axis; harmless (sequential) on 1-TC chips


def _make_yolo1d_kernel(num_classes):
    NC = num_classes

    def kernel(pred_ref, targ_ref, anch_ref, out_ref,
               acc_obj, acc_cnt, acc_noobj, acc_nocnt):
        a_id = pl.program_id(1)       # anchor index
        i_id = pl.program_id(2)       # row-block index (within this core's slice)

        @pl.when(jnp.logical_and(a_id == 0, i_id == 0))
        def _init():
            acc_obj[...] = jnp.zeros_like(acc_obj)
            acc_cnt[...] = jnp.zeros_like(acc_cnt)
            acc_noobj[...] = jnp.zeros_like(acc_noobj)
            acc_nocnt[...] = jnp.zeros_like(acc_nocnt)

        anchor = anch_ref[a_id]        # scalar f32 from SMEM

        t0 = targ_ref[0]               # (BR, 128) objectness: 1.0 obj / 0.0 noobj / -1.0 pad
        tx = targ_ref[1]
        tw = targ_ref[2]
        tcls = targ_ref[3]
        log_tw = targ_ref[4]           # precomputed log(tw/anchor + 1e-6) from the wrapper

        obj_b = t0 == 1.0
        noobj_b = t0 == 0.0

        p0 = pred_ref[0]
        p1 = pred_ref[1]
        p2 = pred_ref[2]

        # ---- no-object loss: BCEWithLogits(p0, t0); share one EUP exp with sigmoid(p0).
        e0 = jnp.exp(-jnp.abs(p0))
        inv0 = pl.reciprocal(1.0 + e0, approx=True)
        sig0 = jnp.where(p0 >= 0.0, inv0, e0 * inv0)          # sigmoid(p0)
        bce = jnp.maximum(p0, 0.0) - p0 * t0 + jnp.log1p(e0)

        # ---- hand-rolled sigmoid(p1): same shared-exp + approx-reciprocal path (no exact div)
        e1 = jnp.exp(-jnp.abs(p1))
        inv1 = pl.reciprocal(1.0 + e1, approx=True)
        sig1 = jnp.where(p1 >= 0.0, inv1, e1 * inv1)

        # ---- object loss: MSE(sigmoid(p0), iou * t0) over obj cells
        pw = jnp.exp(p2 * anchor)
        # TODO(synk): intersection_over_union_1d is not defined in the source module;
        # assuming the standard 1D (center, width) IoU with +1e-6 in the denominator.
        inter = jnp.maximum(
            jnp.minimum(sig1 + 0.5 * pw, tx + 0.5 * tw)
            - jnp.maximum(sig1 - 0.5 * pw, tx - 0.5 * tw),
            0.0)
        union = pw + tw - inter
        iou = inter * pl.reciprocal(union + 1e-6, approx=True)

        # Fold obj/box squared errors into one running per-element term immediately
        # (shorter live ranges; class loss computed last).
        # total = (5*box_sum + class_sum + obj_sum)/n_obj + 10 * noobj_sum/n_noobj
        #   (lambda_box=10 with box MSE mean over 2*n_obj elems -> 5/n_obj)
        obj_term = (sig0 - iou * t0) ** 2
        obj_term = obj_term + 5.0 * ((sig1 - tx) ** 2 + (p2 - log_tw) ** 2)

        # ---- class loss: CrossEntropy(logits, class_id), short unrolled per-class loop
        # (no (N, NC) one-hot materialization).
        m = pred_ref[3]
        for c in range(1, NC):
            m = jnp.maximum(m, pred_ref[3 + c])
        sum_exp = jnp.zeros_like(m)
        picked = jnp.zeros_like(m)
        for c in range(NC):
            lc = pred_ref[3 + c]
            sum_exp = sum_exp + jnp.exp(lc - m)
            picked = picked + jnp.where(tcls == float(c), lc, 0.0)
        obj_term = obj_term + (m - picked) + jnp.log(sum_exp)

        # ---- accumulate into (8,128) vector accumulators: pure VALU adds per step,
        # full cross-lane reduction deferred to the wrapper.
        def row_sum(x):                     # (BR,128) -> (8,128), sublane-group adds
            return jnp.sum(x.reshape(x.shape[0] // 8, 8, 128), axis=0)

        acc_obj[...] += row_sum(jnp.where(obj_b, obj_term, 0.0))
        acc_cnt[...] += row_sum(obj_b.astype(jnp.float32))
        acc_noobj[...] += row_sum(jnp.where(noobj_b, bce, 0.0))
        acc_nocnt[...] += row_sum(noobj_b.astype(jnp.float32))

        @pl.when(jnp.logical_and(a_id == pl.num_programs(1) - 1,
                                 i_id == pl.num_programs(2) - 1))
        def _finalize():
            out_ref[0] = acc_obj[...]
            out_ref[1] = acc_cnt[...]
            out_ref[2] = acc_noobj[...]
            out_ref[3] = acc_nocnt[...]

    return kernel


def yolo1d_loss(predictions, target, anchors, *, block_rows=512):
    """predictions: (B, A, S, 3+NC) f32, target: (B, A, S, 4) f32, anchors: (A,) f32."""
    B, A, S, C = predictions.shape
    NC = C - 3
    M = B * S                                   # elements per anchor

    # Block = BR sublane-rows x 128 lanes.  Keep BR a multiple of 8, big by default
    # (amortize per-step overhead), but shrink so both cores get work on small inputs.
    rows_total = pl.cdiv(M, 128)
    rows_pc = pl.cdiv(rows_total, _NCORES)
    BR = min(block_rows, ((rows_pc + 7) // 8) * 8)
    BR = max(8, (BR // 8) * 8)
    blk = BR * 128
    nb = pl.cdiv(M, blk)
    nb = pl.cdiv(nb, _NCORES) * _NCORES         # row-blocks, multiple of the core count
    nb_pc = nb // _NCORES
    Mp = nb * blk                               # padded per-anchor element count

    anch = anchors.astype(jnp.float32).reshape(A)

    # Channel-major, lane-dense repack (single pass: cast + transpose + extra log channel
    # + pad + reshape; XLA fuses these into one slab rewrite).
    pred_cm = jnp.transpose(predictions.astype(jnp.float32), (1, 3, 0, 2)).reshape(A, C, M)
    targ_t = jnp.transpose(target.astype(jnp.float32), (1, 3, 0, 2)).reshape(A, 4, M)
    log_tw = jnp.log(targ_t[:, 2, :] / anch[:, None] + 1e-6)[:, None, :]   # (A,1,M)
    targ_cm = jnp.concatenate([targ_t, log_tw], axis=1)                    # (A,5,M)
    if Mp != M:
        pred_cm = jnp.pad(pred_cm, ((0, 0), (0, 0), (0, Mp - M)))
        # objectness = -1 on padding => neither obj nor noobj mask fires
        targ_cm = jnp.pad(targ_cm, ((0, 0), (0, 0), (0, Mp - M)), constant_values=-1.0)
    pred4 = pred_cm.reshape(A, C, Mp // 128, 128)
    targ4 = targ_cm.reshape(A, 5, Mp // 128, 128)

    grid_spec = pltpu.PrefetchScalarGridSpec(
        num_scalar_prefetch=0,
        grid=(_NCORES, A, nb_pc),
        in_specs=[
            pl.BlockSpec((None, C, BR, 128), lambda c, a, i: (a, 0, c * nb_pc + i, 0)),
            pl.BlockSpec((None, 5, BR, 128), lambda c, a, i: (a, 0, c * nb_pc + i, 0)),
            pl.BlockSpec(memory_space=pltpu.MemorySpace.SMEM),   # anchors (A,)
        ],
        out_specs=pl.BlockSpec((None, 4, 8, 128), lambda c, a, i: (c, 0, 0, 0)),
        scratch_shapes=[pltpu.VMEM((8, 128), jnp.float32) for _ in range(4)],
    )

    parts = pl.pallas_call(
        _make_yolo1d_kernel(NC),
        out_shape=jax.ShapeDtypeStruct((_NCORES, 4, 8, 128), jnp.float32),
        grid_spec=grid_spec,
        compiler_params=pltpu.CompilerParams(
            dimension_semantics=("parallel", "arbitrary", "arbitrary")),
    )(pred4, targ4, anch)

    # Final cross-core / cross-lane combine in the wrapper (tiny).
    sums = jnp.sum(parts, axis=(0, 2, 3))       # [obj_sum, obj_cnt, noobj_sum, noobj_cnt]
    # NOTE: NaN if there are zero obj (or noobj) cells — same as PyTorch's mean over an
    # empty boolean selection.
    return sums[0] / sums[1] + 10.0 * sums[2] / sums[3]


def ref_loss_numpy(pred, targ, anchors):
    """Pure numpy re-implementation of the PyTorch forward (for verification)."""
    pred = np.asarray(pred, np.float64).copy()
    targ = np.asarray(targ, np.float64).copy()
    anchors = np.asarray(anchors, np.float64)
    sig = lambda x: 1.0 / (1.0 + np.exp(-x))

    obj = targ[..., 0] == 1
    noobj = targ[..., 0] == 0

    x = pred[..., 0:1][noobj]
    y = targ[..., 0:1][noobj]
    bce = np.maximum(x, 0.0) - x * y + np.log1p(np.exp(-np.abs(x)))
    no_obj_loss = bce.mean()

    A = anchors.reshape(1, len(anchors), 1, 1)
    box_pred = np.concatenate([sig(pred[..., 1:2]), np.exp(pred[..., 2:3] * A)], axis=-1)
    b1 = box_pred[obj]
    b2 = targ[..., 1:3][obj]
    inter = np.clip(
        np.minimum(b1[:, 0:1] + b1[:, 1:2] / 2, b2[:, 0:1] + b2[:, 1:2] / 2)
        - np.maximum(b1[:, 0:1] - b1[:, 1:2] / 2, b2[:, 0:1] - b2[:, 1:2] / 2),
        0.0, None)
    union = b1[:, 1:2] + b2[:, 1:2] - inter
    iou = inter / (union + 1e-6)
    object_loss = ((sig(pred[..., 0:1][obj]) - iou * targ[..., 0:1][obj]) ** 2).mean()

    pred[..., 1:2] = sig(pred[..., 1:2])
    targ[..., 2:3] = np.log(targ[..., 2:3] / A + 1e-06)
    box_loss = ((pred[..., 1:3][obj] - targ[..., 1:3][obj]) ** 2).mean()

    logits = pred[..., 3:][obj]
    labels = targ[..., 3][obj].astype(np.int64)
    m = logits.max(-1, keepdims=True)
    lse = m[:, 0] + np.log(np.exp(logits - m).sum(-1))
    class_loss = (lse - logits[np.arange(len(labels)), labels]).mean()

    return 10.0 * box_loss + 1.0 * class_loss + 10.0 * no_obj_loss + 1.0 * object_loss


def _make_inputs(key, B, A, S, NC):
    C = 3 + NC
    kp, ko, kx, kw, kc = jax.random.split(key, 5)
    predictions = jax.random.normal(kp, (B, A, S, C), dtype=jnp.float32)
    obj_mask = (jax.random.uniform(ko, (B, A, S)) < 0.3).astype(jnp.float32)
    tx = jax.random.uniform(kx, (B, A, S), minval=0.2, maxval=0.8)
    tw = jax.random.uniform(kw, (B, A, S), minval=0.2, maxval=1.5)
    tcls = jax.random.randint(kc, (B, A, S), 0, NC).astype(jnp.float32)
    target = jnp.stack([obj_mask, tx, tw, tcls], axis=-1).astype(jnp.float32)
    return predictions, target


if __name__ == "__main__":
    anchors = jnp.array([0.5, 1.0, 2.0], dtype=jnp.float32)   # deterministic "params"
    key = jax.random.PRNGKey(0)

    # (B, A, S, NC, block_rows):
    #   tiny single-block case, a padded multi-row case, and a small-block case that
    #   exercises multi-block-per-core accumulation across anchors and both core slices.
    configs = [(2, 3, 16, 5, 512), (2, 3, 4400, 5, 512), (2, 3, 4400, 5, 16)]
    for cfg_i, (B, A, S, NC, br) in enumerate(configs):
        predictions, target = _make_inputs(jax.random.fold_in(key, cfg_i), B, A, S, NC)

        loss = yolo1d_loss(predictions, target, anchors, block_rows=br)
        loss = jax.block_until_ready(loss)

        ref = ref_loss_numpy(np.asarray(predictions), np.asarray(target), np.asarray(anchors))
        assert np.isfinite(float(loss)), (cfg_i, float(loss))
        assert np.allclose(float(loss), ref, rtol=2e-3, atol=2e-3), (cfg_i, float(loss), ref)

    print("KERNEL_OK")
</pallas_src>

<mosaic_0001>
module attributes {stable_mosaic.version = 11 : i64} {
  func.func @kernel(%arg0: i32, %arg1: i32, %arg2: i32, %arg3: memref<1x8x8x128xf32, #tpu.memory_space<vmem>>, %arg4: memref<1x5x8x128xf32, #tpu.memory_space<vmem>>, %arg5: memref<3xf32, #tpu.memory_space<smem>>, %arg6: memref<1x4x8x128xf32, #tpu.memory_space<vmem>>, %arg7: memref<8x128xf32, #tpu.memory_space<vmem>>, %arg8: memref<8x128xf32, #tpu.memory_space<vmem>>, %arg9: memref<8x128xf32, #tpu.memory_space<vmem>>, %arg10: memref<8x128xf32, #tpu.memory_space<vmem>>) attributes {dimension_semantics = [#tpu.dimension_semantics<parallel>, #tpu.dimension_semantics<arbitrary>, #tpu.dimension_semantics<arbitrary>], iteration_bounds = array<i64: 2, 3, 1>, scalar_prefetch = 0 : i64, scratch_operands = 4 : i64, tpu.core_type = #tpu.core_type<tc>, window_params = [{transform_indices = @transform_0, window_bounds = array<i64: 1, 8, 8, 128>}, {transform_indices = @transform_1, window_bounds = array<i64: 1, 5, 8, 128>}, {transform_indices = @transform_2, window_bounds = array<i64: 3>}, {transform_indices = @transform_3, window_bounds = array<i64: 1, 4, 8, 128>}]} {
    %c0_i32 = arith.constant 0 : i32
    %0 = arith.cmpi eq, %arg1, %c0_i32 : i32
    %c0_i32_0 = arith.constant 0 : i32
    %1 = arith.cmpi eq, %arg2, %c0_i32_0 : i32
    %2 = arith.andi %0, %1 : i1
    %3 = arith.extui %2 : i1 to i32
    %c0_i32_1 = arith.constant 0 : i32
    %4 = arith.cmpi ne, %3, %c0_i32_1 : i32
    scf.if %4 {
      %cst_117 = arith.constant 0.000000e+00 : f32
      %195 = vector.broadcast %cst_117 : f32 to vector<8x128xf32>
      %c0_118 = arith.constant 0 : index
      %c0_119 = arith.constant 0 : index
      %196 = vector.load %arg7[%c0_118, %c0_119] : memref<8x128xf32, #tpu.memory_space<vmem>>, vector<8x128xf32>
      tpu.vector_store %arg7[%c0_118, %c0_119], %195 {strides = array<i32>} : memref<8x128xf32, #tpu.memory_space<vmem>>, vector<8x128xf32>,
      %cst_120 = arith.constant 0.000000e+00 : f32
      %197 = vector.broadcast %cst_120 : f32 to vector<8x128xf32>
      %c0_121 = arith.constant 0 : index
      %c0_122 = arith.constant 0 : index
      %198 = vector.load %arg8[%c0_121, %c0_122] : memref<8x128xf32, #tpu.memory_space<vmem>>, vector<8x128xf32>
      tpu.vector_store %arg8[%c0_121, %c0_122], %197 {strides = array<i32>} : memref<8x128xf32, #tpu.memory_space<vmem>>, vector<8x128xf32>,
      %cst_123 = arith.constant 0.000000e+00 : f32
      %199 = vector.broadcast %cst_123 : f32 to vector<8x128xf32>
      %c0_124 = arith.constant 0 : index
      %c0_125 = arith.constant 0 : index
      %200 = vector.load %arg9[%c0_124, %c0_125] : memref<8x128xf32, #tpu.memory_space<vmem>>, vector<8x128xf32>
      tpu.vector_store %arg9[%c0_124, %c0_125], %199 {strides = array<i32>} : memref<8x128xf32, #tpu.memory_space<vmem>>, vector<8x128xf32>,
      %cst_126 = arith.constant 0.000000e+00 : f32
      %201 = vector.broadcast %cst_126 : f32 to vector<8x128xf32>
      %c0_127 = arith.constant 0 : index
      %c0_128 = arith.constant 0 : index
      %202 = vector.load %arg10[%c0_127, %c0_128] : memref<8x128xf32, #tpu.memory_space<vmem>>, vector<8x128xf32>
      tpu.vector_store %arg10[%c0_127, %c0_128], %201 {strides = array<i32>} : memref<8x128xf32, #tpu.memory_space<vmem>>, vector<8x128xf32>,
    } else {
    }
    %5 = arith.index_cast %arg1 : i32 to index
    %6 = memref.load %arg5[%5] : memref<3xf32, #tpu.memory_space<smem>>
    %c0 = arith.constant 0 : index
    %c0_2 = arith.constant 0 : index
    %c0_3 = arith.constant 0 : index
    %c0_4 = arith.constant 0 : index
    %7 = vector.load %arg4[%c0, %c0_2, %c0_3, %c0_4] : memref<1x5x8x128xf32, #tpu.memory_space<vmem>>, vector<1x1x8x128xf32>
    %8 = vector.shape_cast %7 : vector<1x1x8x128xf32> to vector<8x128xf32>
    %c0_5 = arith.constant 0 : index
    %c1 = arith.constant 1 : index
    %c0_6 = arith.constant 0 : index
    %c0_7 = arith.constant 0 : index
    %9 = vector.load %arg4[%c0_5, %c1, %c0_6, %c0_7] : memref<1x5x8x128xf32, #tpu.memory_space<vmem>>, vector<1x1x8x128xf32>
    %10 = vector.shape_cast %9 : vector<1x1x8x128xf32> to vector<8x128xf32>
    %c0_8 = arith.constant 0 : index
    %c2 = arith.constant 2 : index
    %c0_9 = arith.constant 0 : index
    %c0_10 = arith.constant 0 : index
    %11 = vector.load %arg4[%c0_8, %c2, %c0_9, %c0_10] : memref<1x5x8x128xf32, #tpu.memory_space<vmem>>, vector<1x1x8x128xf32>
    %12 = vector.shape_cast %11 : vector<1x1x8x128xf32> to vector<8x128xf32>
    %c0_11 = arith.constant 0 : index
    %c3 = arith.constant 3 : index
    %c0_12 = arith.constant 0 : index
    %c0_13 = arith.constant 0 : index
    %13 = vector.load %arg4[%c0_11, %c3, %c0_12, %c0_13] : memref<1x5x8x128xf32, #tpu.memory_space<vmem>>, vector<1x1x8x128xf32>
    %14 = vector.shape_cast %13 : vector<1x1x8x128xf32> to vector<8x128xf32>
    %c0_14 = arith.constant 0 : index
    %c4 = arith.constant 4 : index
    %c0_15 = arith.constant 0 : index
    %c0_16 = arith.constant 0 : index
    %15 = vector.load %arg4[%c0_14, %c4, %c0_15, %c0_16] : memref<1x5x8x128xf32, #tpu.memory_space<vmem>>, vector<1x1x8x128xf32>
    %16 = vector.shape_cast %15 : vector<1x1x8x128xf32> to vector<8x128xf32>
    %cst = arith.constant 1.000000e+00 : f32
    %17 = vector.broadcast %cst : f32 to vector<8x128xf32>
    %18 = arith.cmpf oeq, %8, %17 : vector<8x128xf32>
    %cst_17 = arith.constant 0.000000e+00 : f32
    %19 = vector.broadcast %cst_17 : f32 to vector<8x128xf32>
    %20 = arith.cmpf oeq, %8, %19 : vector<8x128xf32>
    %c0_18 = arith.constant 0 : index
    %c0_19 = arith.constant 0 : index
    %c0_20 = arith.constant 0 : index
    %c0_21 = arith.constant 0 : index
    %21 = vector.load %arg3[%c0_18, %c0_19, %c0_20, %c0_21] : memref<1x8x8x128xf32, #tpu.memory_space<vmem>>, vector<1x1x8x128xf32>
    %22 = vector.shape_cast %21 : vector<1x1x8x128xf32> to vector<8x128xf32>
    %c0_22 = arith.constant 0 : index
    %c1_23 = arith.constant 1 : index
    %c0_24 = arith.constant 0 : index
    %c0_25 = arith.constant 0 : index
    %23 = vector.load %arg3[%c0_22, %c1_23, %c0_24, %c0_25] : memref<1x8x8x128xf32, #tpu.memory_space<vmem>>, vector<1x1x8x128xf32>
    %24 = vector.shape_cast %23 : vector<1x1x8x128xf32> to vector<8x128xf32>
    %c0_26 = arith.constant 0 : index
    %c2_27 = arith.constant 2 : index
    %c0_28 = arith.constant 0 : index
    %c0_29 = arith.constant 0 : index
    %25 = vector.load %arg3[%c0_26, %c2_27, %c0_28, %c0_29] : memref<1x8x8x128xf32, #tpu.memory_space<vmem>>, vector<1x1x8x128xf32>
    %26 = vector.shape_cast %25 : vector<1x1x8x128xf32> to vector<8x128xf32>
    %27 = math.absf %22 : vector<8x128xf32>
    %cst_30 = arith.constant 0.000000e+00 : f32
    %28 = vector.broadcast %cst_30 : f32 to vector<8x128xf32>
    %29 = arith.subf %28, %27 : vector<8x128xf32>
    %30 = math.exp %29 : vector<8x128xf32>
    %cst_31 = arith.constant 1.000000e+00 : f32
    %31 = vector.broadcast %cst_31 : f32 to vector<8x128xf32>
    %32 = arith.addf %31, %30 : vector<8x128xf32>
    %33 = tpu.reciprocal %32 {approx = true} : vector<8x128xf32> -> vector<8x128xf32>
    %cst_32 = arith.constant 0.000000e+00 : f32
    %34 = vector.broadcast %cst_32 : f32 to vector<8x128xf32>
    %35 = arith.cmpf oge, %22, %34 : vector<8x128xf32>
    %36 = arith.mulf %30, %33 : vector<8x128xf32>
    %37 = arith.select %35, %33, %36 : vector<8x128xi1>, vector<8x128xf32>
    %cst_33 = arith.constant 0.000000e+00 : f32
    %38 = vector.broadcast %cst_33 : f32 to vector<8x128xf32>
    %39 = arith.maximumf %22, %38 : vector<8x128xf32>
    %40 = arith.mulf %22, %8 : vector<8x128xf32>
    %41 = arith.subf %39, %40 : vector<8x128xf32>
    %42 = math.log1p %30 : vector<8x128xf32>
    %43 = arith.addf %41, %42 : vector<8x128xf32>
    %44 = math.absf %24 : vector<8x128xf32>
    %cst_34 = arith.constant 0.000000e+00 : f32
    %45 = vector.broadcast %cst_34 : f32 to vector<8x128xf32>
    %46 = arith.subf %45, %44 : vector<8x128xf32>
    %47 = math.exp %46 : vector<8x128xf32>
    %cst_35 = arith.constant 1.000000e+00 : f32
    %48 = vector.broadcast %cst_35 : f32 to vector<8x128xf32>
    %49 = arith.addf %48, %47 : vector<8x128xf32>
    %50 = tpu.reciprocal %49 {approx = true} : vector<8x128xf32> -> vector<8x128xf32>
    %cst_36 = arith.constant 0.000000e+00 : f32
    %51 = vector.broadcast %cst_36 : f32 to vector<8x128xf32>
    %52 = arith.cmpf oge, %24, %51 : vector<8x128xf32>
    %53 = arith.mulf %47, %50 : vector<8x128xf32>
    %54 = arith.select %52, %50, %53 : vector<8x128xi1>, vector<8x128xf32>
    %55 = vector.broadcast %6 : f32 to vector<8x128xf32>
    %56 = arith.mulf %26, %55 : vector<8x128xf32>
    %57 = math.exp %56 : vector<8x128xf32>
    %cst_37 = arith.constant 5.000000e-01 : f32
    %58 = vector.broadcast %cst_37 : f32 to vector<8x128xf32>
    %59 = arith.mulf %58, %57 : vector<8x128xf32>
    %60 = arith.addf %54, %59 : vector<8x128xf32>
    %cst_38 = arith.constant 5.000000e-01 : f32
    %61 = vector.broadcast %cst_38 : f32 to vector<8x128xf32>
    %62 = arith.mulf %61, %12 : vector<8x128xf32>
    %63 = arith.addf %10, %62 : vector<8x128xf32>
    %64 = arith.minimumf %60, %63 : vector<8x128xf32>
    %cst_39 = arith.constant 5.000000e-01 : f32
    %65 = vector.broadcast %cst_39 : f32 to vector<8x128xf32>
    %66 = arith.mulf %65, %57 : vector<8x128xf32>
    %67 = arith.subf %54, %66 : vector<8x128xf32>
    %cst_40 = arith.constant 5.000000e-01 : f32
    %68 = vector.broadcast %cst_40 : f32 to vector<8x128xf32>
    %69 = arith.mulf %68, %12 : vector<8x128xf32>
    %70 = arith.subf %10, %69 : vector<8x128xf32>
    %71 = arith.maximumf %67, %70 : vector<8x128xf32>
    %72 = arith.subf %64, %71 : vector<8x128xf32>
    %cst_41 = arith.constant 0.000000e+00 : f32
    %73 = vector.broadcast %cst_41 : f32 to vector<8x128xf32>
    %74 = arith.maximumf %72, %73 : vector<8x128xf32>
    %75 = arith.addf %57, %12 : vector<8x128xf32>
    %76 = arith.subf %75, %74 : vector<8x128xf32>
    %cst_42 = arith.constant 9.99999997E-7 : f32
    %77 = vector.broadcast %cst_42 : f32 to vector<8x128xf32>
    %78 = arith.addf %76, %77 : vector<8x128xf32>
    %79 = tpu.reciprocal %78 {approx = true} : vector<8x128xf32> -> vector<8x128xf32>
    %80 = arith.mulf %74, %79 : vector<8x128xf32>
    %81 = arith.mulf %80, %8 : vector<8x128xf32>
    %82 = arith.subf %37, %81 : vector<8x128xf32>
    %83 = arith.mulf %82, %82 : vector<8x128xf32>
    %84 = arith.subf %54, %10 : vector<8x128xf32>
    %85 = arith.mulf %84, %84 : vector<8x128xf32>
    %86 = arith.subf %26, %16 : vector<8x128xf32>
    %87 = arith.mulf %86, %86 : vector<8x128xf32>
    %88 = arith.addf %85, %87 : vector<8x128xf32>
    %cst_43 = arith.constant 5.000000e+00 : f32
    %89 = vector.broadcast %cst_43 : f32 to vector<8x128xf32>
    %90 = arith.mulf %89, %88 : vector<8x128xf32>
    %91 = arith.addf %83, %90 : vector<8x128xf32>
    %c0_44 = arith.constant 0 : index
    %c3_45 = arith.constant 3 : index
    %c0_46 = arith.constant 0 : index
    %c0_47 = arith.constant 0 : index
    %92 = vector.load %arg3[%c0_44, %c3_45, %c0_46, %c0_47] : memref<1x8x8x128xf32, #tpu.memory_space<vmem>>, vector<1x1x8x128xf32>
    %93 = vector.shape_cast %92 : vector<1x1x8x128xf32> to vector<8x128xf32>
    %c0_48 = arith.constant 0 : index
    %c4_49 = arith.constant 4 : index
    %c0_50 = arith.constant 0 : index
    %c0_51 = arith.constant 0 : index
    %94 = vector.load %arg3[%c0_48, %c4_49, %c0_50, %c0_51] : memref<1x8x8x128xf32, #tpu.memory_space<vmem>>, vector<1x1x8x128xf32>
    %95 = vector.shape_cast %94 : vector<1x1x8x128xf32> to vector<8x128xf32>
    %96 = arith.maximumf %93, %95 : vector<8x128xf32>
    %c0_52 = arith.constant 0 : index
    %c5 = arith.constant 5 : index
    %c0_53 = arith.constant 0 : index
    %c0_54 = arith.constant 0 : index
    %97 = vector.load %arg3[%c0_52, %c5, %c0_53, %c0_54] : memref<1x8x8x128xf32, #tpu.memory_space<vmem>>, vector<1x1x8x128xf32>
    %98 = vector.shape_cast %97 : vector<1x1x8x128xf32> to vector<8x128xf32>
    %99 = arith.maximumf %96, %98 : vector<8x128xf32>
    %c0_55 = arith.constant 0 : index
    %c6 = arith.constant 6 : index
    %c0_56 = arith.constant 0 : index
    %c0_57 = arith.constant 0 : index
    %100 = vector.load %arg3[%c0_55, %c6, %c0_56, %c0_57] : memref<1x8x8x128xf32, #tpu.memory_space<vmem>>, vector<1x1x8x128xf32>
    %101 = vector.shape_cast %100 : vector<1x1x8x128xf32> to vector<8x128xf32>
    %102 = arith.maximumf %99, %101 : vector<8x128xf32>
    %c0_58 = arith.constant 0 : index
    %c7 = arith.constant 7 : index
    %c0_59 = arith.constant 0 : index
    %c0_60 = arith.constant 0 : index
    %103 = vector.load %arg3[%c0_58, %c7, %c0_59, %c0_60] : memref<1x8x8x128xf32, #tpu.memory_space<vmem>>, vector<1x1x8x128xf32>
    %104 = vector.shape_cast %103 : vector<1x1x8x128xf32> to vector<8x128xf32>
    %105 = arith.maximumf %102, %104 : vector<8x128xf32>
    %cst_61 = arith.constant 0.000000e+00 : f32
    %106 = vector.broadcast %cst_61 : f32 to vector<8x128xf32>
    %cst_62 = arith.constant 0.000000e+00 : f32
    %107 = vector.broadcast %cst_62 : f32 to vector<8x128xf32>
    %c0_63 = arith.constant 0 : index
    %c3_64 = arith.constant 3 : index
    %c0_65 = arith.constant 0 : index
    %c0_66 = arith.constant 0 : index
    %108 = vector.load %arg3[%c0_63, %c3_64, %c0_65, %c0_66] : memref<1x8x8x128xf32, #tpu.memory_space<vmem>>, vector<1x1x8x128xf32>
    %109 = vector.shape_cast %108 : vector<1x1x8x128xf32> to vector<8x128xf32>
    %110 = arith.subf %109, %105 : vector<8x128xf32>
    %111 = math.exp %110 : vector<8x128xf32>
    %112 = arith.addf %106, %111 : vector<8x128xf32>
    %cst_67 = arith.constant 0.000000e+00 : f32
    %113 = vector.broadcast %cst_67 : f32 to vector<8x128xf32>
    %114 = arith.cmpf oeq, %14, %113 : vector<8x128xf32>
    %cst_68 = arith.constant 0.000000e+00 : f32
    %115 = vector.broadcast %cst_68 : f32 to vector<8x128xf32>
    %116 = arith.select %114, %109, %115 : vector<8x128xi1>, vector<8x128xf32>
    %117 = arith.addf %107, %116 : vector<8x128xf32>
    %c0_69 = arith.constant 0 : index
    %c4_70 = arith.constant 4 : index
    %c0_71 = arith.constant 0 : index
    %c0_72 = arith.constant 0 : index
    %118 = vector.load %arg3[%c0_69, %c4_70, %c0_71, %c0_72] : memref<1x8x8x128xf32, #tpu.memory_space<vmem>>, vector<1x1x8x128xf32>
    %119 = vector.shape_cast %118 : vector<1x1x8x128xf32> to vector<8x128xf32>
    %120 = arith.subf %119, %105 : vector<8x128xf32>
    %121 = math.exp %120 : vector<8x128xf32>
    %122 = arith.addf %112, %121 : vector<8x128xf32>
    %cst_73 = arith.constant 1.000000e+00 : f32
    %123 = vector.broadcast %cst_73 : f32 to vector<8x128xf32>
    %124 = arith.cmpf oeq, %14, %123 : vector<8x128xf32>
    %cst_74 = arith.constant 0.000000e+00 : f32
    %125 = vector.broadcast %cst_74 : f32 to vector<8x128xf32>
    %126 = arith.select %124, %119, %125 : vector<8x128xi1>, vector<8x128xf32>
    %127 = arith.addf %117, %126 : vector<8x128xf32>
    %c0_75 = arith.constant 0 : index
    %c5_76 = arith.constant 5 : index
    %c0_77 = arith.constant 0 : index
    %c0_78 = arith.constant 0 : index
    %128 = vector.load %arg3[%c0_75, %c5_76, %c0_77, %c0_78] : memref<1x8x8x128xf32, #tpu.memory_space<vmem>>, vector<1x1x8x128xf32>
    %129 = vector.shape_cast %128 : vector<1x1x8x128xf32> to vector<8x128xf32>
    %130 = arith.subf %129, %105 : vector<8x128xf32>
    %131 = math.exp %130 : vector<8x128xf32>
    %132 = arith.addf %122, %131 : vector<8x128xf32>
    %cst_79 = arith.constant 2.000000e+00 : f32
    %133 = vector.broadcast %cst_79 : f32 to vector<8x128xf32>
    %134 = arith.cmpf oeq, %14, %133 : vector<8x128xf32>
    %cst_80 = arith.constant 0.000000e+00 : f32
    %135 = vector.broadcast %cst_80 : f32 to vector<8x128xf32>
    %136 = arith.select %134, %129, %135 : vector<8x128xi1>, vector<8x128xf32>
    %137 = arith.addf %127, %136 : vector<8x128xf32>
    %c0_81 = arith.constant 0 : index
    %c6_82 = arith.constant 6 : index
    %c0_83 = arith.constant 0 : index
    %c0_84 = arith.constant 0 : index
    %138 = vector.load %arg3[%c0_81, %c6_82, %c0_83, %c0_84] : memref<1x8x8x128xf32, #tpu.memory_space<vmem>>, vector<1x1x8x128xf32>
    %139 = vector.shape_cast %138 : vector<1x1x8x128xf32> to vector<8x128xf32>
    %140 = arith.subf %139, %105 : vector<8x128xf32>
    %141 = math.exp %140 : vector<8x128xf32>
    %142 = arith.addf %132, %141 : vector<8x128xf32>
    %cst_85 = arith.constant 3.000000e+00 : f32
    %143 = vector.broadcast %cst_85 : f32 to vector<8x128xf32>
    %144 = arith.cmpf oeq, %14, %143 : vector<8x128xf32>
    %cst_86 = arith.constant 0.000000e+00 : f32
    %145 = vector.broadcast %cst_86 : f32 to vector<8x128xf32>
    %146 = arith.select %144, %139, %145 : vector<8x128xi1>, vector<8x128xf32>
    %147 = arith.addf %137, %146 : vector<8x128xf32>
    %c0_87 = arith.constant 0 : index
    %c7_88 = arith.constant 7 : index
    %c0_89 = arith.constant 0 : index
    %c0_90 = arith.constant 0 : index
    %148 = vector.load %arg3[%c0_87, %c7_88, %c0_89, %c0_90] : memref<1x8x8x128xf32, #tpu.memory_space<vmem>>, vector<1x1x8x128xf32>
    %149 = vector.shape_cast %148 : vector<1x1x8x128xf32> to vector<8x128xf32>
    %150 = arith.subf %149, %105 : vector<8x128xf32>
    %151 = math.exp %150 : vector<8x128xf32>
    %152 = arith.addf %142, %151 : vector<8x128xf32>
    %cst_91 = arith.constant 4.000000e+00 : f32
    %153 = vector.broadcast %cst_91 : f32 to vector<8x128xf32>
    %154 = arith.cmpf oeq, %14, %153 : vector<8x128xf32>
    %cst_92 = arith.constant 0.000000e+00 : f32
    %155 = vector.broadcast %cst_92 : f32 to vector<8x128xf32>
    %156 = arith.select %154, %149, %155 : vector<8x128xi1>, vector<8x128xf32>
    %157 = arith.addf %147, %156 : vector<8x128xf32>
    %158 = arith.subf %105, %157 : vector<8x128xf32>
    %159 = arith.addf %91, %158 : vector<8x128xf32>
    %160 = math.log %152 : vector<8x128xf32>
    %161 = arith.addf %159, %160 : vector<8x128xf32>
    %c0_93 = arith.constant 0 : index
    %c0_94 = arith.constant 0 : index
    %162 = vector.load %arg7[%c0_93, %c0_94] : memref<8x128xf32, #tpu.memory_space<vmem>>, vector<8x128xf32>
    %cst_95 = arith.constant 0.000000e+00 : f32
    %163 = vector.broadcast %cst_95 : f32 to vector<8x128xf32>
    %164 = arith.select %18, %161, %163 : vector<8x128xi1>, vector<8x128xf32>
    %165 = vector.shape_cast %164 : vector<8x128xf32> to vector<1x8x128xf32>
    %cst_96 = arith.constant dense<0.000000e+00> : vector<8x128xf32>
    %166 = vector.multi_reduction <add>, %165, %cst_96 [0] : vector<1x8x128xf32> to vector<8x128xf32>
    %167 = arith.addf %162, %166 : vector<8x128xf32>
    %c0_97 = arith.constant 0 : index
    %c0_98 = arith.constant 0 : index
    %168 = vector.load %arg7[%c0_97, %c0_98] : memref<8x128xf32, #tpu.memory_space<vmem>>, vector<8x128xf32>
    tpu.vector_store %arg7[%c0_97, %c0_98], %167 {strides = array<i32>} : memref<8x128xf32, #tpu.memory_space<vmem>>, vector<8x128xf32>,
    %c0_99 = arith.constant 0 : index
    %c0_100 = arith.constant 0 : index
    %169 = vector.load %arg8[%c0_99, %c0_100] : memref<8x128xf32, #tpu.memory_space<vmem>>, vector<8x128xf32>
    %170 = arith.extui %18 : vector<8x128xi1> to vector<8x128xi32>
    %171 = arith.sitofp %170 : vector<8x128xi32> to vector<8x128xf32>
    %172 = vector.shape_cast %171 : vector<8x128xf32> to vector<1x8x128xf32>
    %cst_101 = arith.constant dense<0.000000e+00> : vector<8x128xf32>
    %173 = vector.multi_reduction <add>, %172, %cst_101 [0] : vector<1x8x128xf32> to vector<8x128xf32>
    %174 = arith.addf %169, %173 : vector<8x128xf32>
    %c0_102 = arith.constant 0 : index
    %c0_103 = arith.constant 0 : index
    %175 = vector.load %arg8[%c0_102, %c0_103] : memref<8x128xf32, #tpu.memory_space<vmem>>, vector<8x128xf32>
    tpu.vector_store %arg8[%c0_102, %c0_103], %174 {strides = array<i32>} : memref<8x128xf32, #tpu.memory_space<vmem>>, vector<8x128xf32>,
    %c0_104 = arith.constant 0 : index
    %c0_105 = arith.constant 0 : index
    %176 = vector.load %arg9[%c0_104, %c0_105] : memref<8x128xf32, #tpu.memory_space<vmem>>, vector<8x128xf32>
    %cst_106 = arith.constant 0.000000e+00 : f32
    %177 = vector.broadcast %cst_106 : f32 to vector<8x128xf32>
    %178 = arith.select %20, %43, %177 : vector<8x128xi1>, vector<8x128xf32>
    %179 = vector.shape_cast %178 : vector<8x128xf32> to vector<1x8x128xf32>
    %cst_107 = arith.constant dense<0.000000e+00> : vector<8x128xf32>
    %180 = vector.multi_reduction <add>, %179, %cst_107 [0] : vector<1x8x128xf32> to vector<8x128xf32>
    %181 = arith.addf %176, %180 : vector<8x128xf32>
    %c0_108 = arith.constant 0 : index
    %c0_109 = arith.constant 0 : index
    %182 = vector.load %arg9[%c0_108, %c0_109] : memref<8x128xf32, #tpu.memory_space<vmem>>, vector<8x128xf32>
    tpu.vector_store %arg9[%c0_108, %c0_109], %181 {strides = array<i32>} : memref<8x128xf32, #tpu.memory_space<vmem>>, vector<8x128xf32>,
    %c0_110 = arith.constant 0 : index
    %c0_111 = arith.constant 0 : index
    %183 = vector.load %arg10[%c0_110, %c0_111] : memref<8x128xf32, #tpu.memory_space<vmem>>, vector<8x128xf32>
    %184 = arith.extui %20 : vector<8x128xi1> to vector<8x128xi32>
    %185 = arith.sitofp %184 : vector<8x128xi32> to vector<8x128xf32>
    %186 = vector.shape_cast %185 : vector<8x128xf32> to vector<1x8x128xf32>
    %cst_112 = arith.constant dense<0.000000e+00> : vector<8x128xf32>
    %187 = vector.multi_reduction <add>, %186, %cst_112 [0] : vector<1x8x128xf32> to vector<8x128xf32>
    %188 = arith.addf %183, %187 : vector<8x128xf32>
    %c0_113 = arith.constant 0 : index
    %c0_114 = arith.constant 0 : index
    %189 = vector.load %arg10[%c0_113, %c0_114] : memref<8x128xf32, #tpu.memory_space<vmem>>, vector<8x128xf32>
    tpu.vector_store %arg10[%c0_113, %c0_114], %188 {strides = array<i32>} : memref<8x128xf32, #tpu.memory_space<vmem>>, vector<8x128xf32>,
    %c2_i32 = arith.constant 2 : i32
    %190 = arith.cmpi eq, %arg1, %c2_i32 : i32
    %c0_i32_115 = arith.constant 0 : i32
    %191 = arith.cmpi eq, %arg2, %c0_i32_115 : i32
    %192 = arith.andi %190, %191 : i1
    %193 = arith.extui %192 : i1 to i32
    %c0_i32_116 = arith.constant 0 : i32
    %194 = arith.cmpi ne, %193, %c0_i32_116 : i32
    scf.if %194 {
      %c0_117 = arith.constant 0 : index
      %c0_118 = arith.constant 0 : index
      %195 = vector.load %arg7[%c0_117, %c0_118] : memref<8x128xf32, #tpu.memory_space<vmem>>, vector<8x128xf32>
      %c0_119 = arith.constant 0 : index
      %c0_120 = arith.constant 0 : index
      %c0_121 = arith.constant 0 : index
      %c0_122 = arith.constant 0 : index
      %196 = vector.load %arg6[%c0_119, %c0_120, %c0_121, %c0_122] : memref<1x4x8x128xf32, #tpu.memory_space<vmem>>, vector<1x1x8x128xf32>
      %197 = vector.shape_cast %196 : vector<1x1x8x128xf32> to vector<8x128xf32>
      %198 = vector.shape_cast %195 : vector<8x128xf32> to vector<1x1x8x128xf32>
      tpu.vector_store %arg6[%c0_119, %c0_120, %c0_121, %c0_122], %198 {strides = array<i32>} : memref<1x4x8x128xf32, #tpu.memory_space<vmem>>, vector<1x1x8x128xf32>,
      %c0_123 = arith.constant 0 : index
      %c0_124 = arith.constant 0 : index
      %199 = vector.load %arg8[%c0_123, %c0_124] : memref<8x128xf32, #tpu.memory_space<vmem>>, vector<8x128xf32>
      %c0_125 = arith.constant 0 : index
      %c1_126 = arith.constant 1 : index
      %c0_127 = arith.constant 0 : index
      %c0_128 = arith.constant 0 : index
      %200 = vector.load %arg6[%c0_125, %c1_126, %c0_127, %c0_128] : memref<1x4x8x128xf32, #tpu.memory_space<vmem>>, vector<1x1x8x128xf32>
      %201 = vector.shape_cast %200 : vector<1x1x8x128xf32> to vector<8x128xf32>
      %202 = vector.shape_cast %199 : vector<8x128xf32> to vector<1x1x8x128xf32>
      tpu.vector_store %arg6[%c0_125, %c1_126, %c0_127, %c0_128], %202 {strides = array<i32>} : memref<1x4x8x128xf32, #tpu.memory_space<vmem>>, vector<1x1x8x128xf32>,
      %c0_129 = arith.constant 0 : index
      %c0_130 = arith.constant 0 : index
      %203 = vector.load %arg9[%c0_129, %c0_130] : memref<8x128xf32, #tpu.memory_space<vmem>>, vector<8x128xf32>
      %c0_131 = arith.constant 0 : index
      %c2_132 = arith.constant 2 : index
      %c0_133 = arith.constant 0 : index
      %c0_134 = arith.constant 0 : index
      %204 = vector.load %arg6[%c0_131, %c2_132, %c0_133, %c0_134] : memref<1x4x8x128xf32, #tpu.memory_space<vmem>>, vector<1x1x8x128xf32>
      %205 = vector.shape_cast %204 : vector<1x1x8x128xf32> to vector<8x128xf32>
      %206 = vector.shape_cast %203 : vector<8x128xf32> to vector<1x1x8x128xf32>
      tpu.vector_store %arg6[%c0_131, %c2_132, %c0_133, %c0_134], %206 {strides = array<i32>} : memref<1x4x8x128xf32, #tpu.memory_space<vmem>>, vector<1x1x8x128xf32>,
      %c0_135 = arith.constant 0 : index
      %c0_136 = arith.constant 0 : index
      %207 = vector.load %arg10[%c0_135, %c0_136] : memref<8x128xf32, #tpu.memory_space<vmem>>, vector<8x128xf32>
      %c0_137 = arith.constant 0 : index
      %c3_138 = arith.constant 3 : index
      %c0_139 = arith.constant 0 : index
      %c0_140 = arith.constant 0 : index
      %208 = vector.load %arg6[%c0_137, %c3_138, %c0_139, %c0_140] : memref<1x4x8x128xf32, #tpu.memory_space<vmem>>, vector<1x1x8x128xf32>
      %209 = vector.shape_cast %208 : vector<1x1x8x128xf32> to vector<8x128xf32>
      %210 = vector.shape_cast %207 : vector<8x128xf32> to vector<1x1x8x128xf32>
      tpu.vector_store %arg6[%c0_137, %c3_138, %c0_139, %c0_140], %210 {strides = array<i32>} : memref<1x4x8x128xf32, #tpu.memory_space<vmem>>, vector<1x1x8x128xf32>,
    } else {
    }
    return
  }
  func.func @transform_0(%arg0: i32, %arg1: i32, %arg2: i32) -> (i32, i32, i32, i32) {
    %c1_i32 = arith.constant 1 : i32
    %0 = arith.muli %arg0, %c1_i32 : i32
    %1 = arith.addi %0, %arg2 : i32
    %c0_i32 = arith.constant 0 : i32
    %c0_i32_0 = arith.constant 0 : i32
    %c0_i32_1 = arith.constant 0 : i32
    return %arg1, %c0_i32, %1, %c0_i32_0 : i32, i32, i32, i32
  }
  func.func @transform_1(%arg0: i32, %arg1: i32, %arg2: i32) -> (i32, i32, i32, i32) {
    %c1_i32 = arith.constant 1 : i32
    %0 = arith.muli %arg0, %c1_i32 : i32
    %1 = arith.addi %0, %arg2 : i32
    %c0_i32 = arith.constant 0 : i32
    %c0_i32_0 = arith.constant 0 : i32
    %c0_i32_1 = arith.constant 0 : i32
    return %arg1, %c0_i32, %1, %c0_i32_0 : i32, i32, i32, i32
  }
  func.func @transform_2(%arg0: i32, %arg1: i32, %arg2: i32) -> i32 {
    %c0_i32 = arith.constant 0 : i32
    %c0_i32_0 = arith.constant 0 : i32
    return %c0_i32 : i32
  }
  func.func @transform_3(%arg0: i32, %arg1: i32, %arg2: i32) -> (i32, i32, i32, i32) {
    %c0_i32 = arith.constant 0 : i32
    %c0_i32_0 = arith.constant 0 : i32
    %c0_i32_1 = arith.constant 0 : i32
    %c0_i32_2 = arith.constant 0 : i32
    return %arg0, %c0_i32, %c0_i32_0, %c0_i32_1 : i32, i32, i32, i32
  }
}

</mosaic_0001>

<llo_original>
// kernel: tpu_custom_call.1
$region0: #{tpu_custom_call.1}
  #allocation0 [shape = 'u32[]', space=smem, size = 0x4, offset = 0x4, fixed_abs, tag = 'smem constant byte address 0x4 - core index']
  #allocation1 [shape = 'u32[72,128]{1,0:T(1,128)}', space=vmem, size = 0x9000, scoped, tag = 'internal scratch']
  #allocation2 [shape = 'f32[8,128]{1,0:T(8,128)}', space=vmem, size = 0x1000, scoped, tag = 'scratch operand']
  #allocation3 [shape = 'f32[8,128]{1,0:T(8,128)}', space=vmem, size = 0x1000, scoped, tag = 'scratch operand']
  #allocation4 [shape = 'f32[8,128]{1,0:T(8,128)}', space=vmem, size = 0x1000, scoped, tag = 'scratch operand']
  #allocation5 [shape = 'f32[8,128]{1,0:T(8,128)}', space=vmem, size = 0x1000, scoped, tag = 'scratch operand']
  %s0 = inlined_call_operand.hbm [shape: f32[3,8,16,128], index: 0, kind: input, shape index: {}]
  %s1 = inlined_call_operand.hbm [shape: f32[3,5,16,128], index: 1, kind: input, shape index: {}]
  %s2 = inlined_call_operand.vmem [shape: f32[3], index: 2, kind: input, shape index: {}]
  %s3 = inlined_call_operand.hbm [shape: f32[2,4,8,128], index: 3, kind: output, shape index: {}]
  %s4 = sld [smem:[#allocation0]]
  $region65: #{tpu_custom_call.1} parent=0
    _
  %s6 = ssub.s32 1, %s4
  %s7 = scalar_select 0, %s6, %s4
  $region1: #{tpu_custom_call.1} parent=0
    #allocation6 [shape = 'u8[65536]{0}', space=vmem, size = 0x10000, scoped, tag = 'input window, operand 0']
    #allocation7 [shape = 's32[2]{0}', space=sflag, size = 0x8, scoped, tag = 'scoped memory for tpu_custom_call.1']
    #allocation8 [shape = 's32[2]{0}', space=sflag, size = 0x8, scoped, tag = 'scoped memory for tpu_custom_call.1']
    #allocation9 [shape = 's32[2]{0}', space=sflag, size = 0x8, scoped, tag = 'scoped memory for tpu_custom_call.1']
    #allocation10 [shape = 'u8[40960]{0}', space=vmem, size = 0xa000, scoped, tag = 'input window, operand 1']
    #allocation11 [shape = 's32[2]{0}', space=sflag, size = 0x8, scoped, tag = 'scoped memory for tpu_custom_call.1']
    #allocation12 [shape = 'u8[512]{0}', space=smem, size = 0x200, scoped, tag = 'input window, operand 2, single buffered']
    #allocation13 [shape = 'u8[32768]{0}', space=vmem, size = 0x8000, scoped, tag = 'output window, operand 0']
    %8 = vsyncpa [#allocation7], 0
    %s9 = scalar_lea.sflag [#allocation7], 1
    %10 = vsyncpa %s9, 0
    %11 = vsyncpa [#allocation11], 0
    %s12 = scalar_lea.sflag [#allocation11], 1
    %13 = vsyncpa %s12, 0
    %14 = vsyncpa [#allocation9], 0
    %15 = vsyncpa [#allocation8], 0
    %s16 = scalar_lea.sflag [#allocation8], 1
    %17 = vsyncpa %s16, 0
    loop: start=0, step=1, limit=8
    $region2: #{tpu_custom_call.1} parent=1 // loop_pre_header
      _
    $region3: #{tpu_custom_call.1} parent=1 // loop_header
      %s19 = sphi 0, %s23
      %p20 = scmp.ge.s32.totalorder %s19, 8
      %s26 = sphi 0, %s45
      %s27 = sphi 0, %s41
      %s28 = sphi 0, %s37
      %s29 = sphi 0, %s26
      %s30 = sphi 0, %s27
      %s31 = sphi 0, %s28
      %s32 = sphi 0, %s29
      %s33 = sphi 0, %s30
      %s34 = sphi 0, %s31
      %s52 = sphi 0, %s54
      %s55 = sphi 0, %s52
      %s56 = sphi 0, %s55
      %s72 = sphi 0, %s56
      %s82 = sphi 0, %s84
      %s85 = sphi 0, %s82
      %s86 = sphi 0, %s85
      %s102 = sphi 0, %s86
      %s106 = sphi 0, %s106
      %s108 = sphi 0, %s106
      %s109 = sphi 0, %s108
      %s123 = sphi 0, %s109
      %s129 = sphi 0, %s131
      %s132 = sphi 0, %s129
      %s133 = sphi 0, %s132
      %s149 = sphi 0, %s133
    $region4: #{tpu_custom_call.1} parent=1 // loop_header_branch
      %22 = sbr.rel (%p20) target = $region8
    $region5: #{tpu_custom_call.1} parent=1 // loop_body
      %s24 = ssub.s32 %s19, 1
      %s25 = ssub.s32 %s19, 2
      %s35 = sadd.s32 1, %s28
      %p36 = scmp.ge.s32.totalorder %s35, 1
      %s37 = scalar_select %p36, 0, %s35
      %s38 = sadd.s32 1, %s27
      %s39 = scalar_select %p36, %s38, %s27
      %p40 = scmp.ge.s32.totalorder %s39, 3
      %s41 = scalar_select %p40, 0, %s39
      %s42 = sadd.s32 1, %s26
      %s43 = scalar_select %p40, %s42, %s26
      %p44 = scmp.ge.s32.totalorder %s43, 2
      %s45 = scalar_select %p44, 0, %s43
      %s46 = sadd.s32 %s26, %s28
      %s47 = sadd.s32 %s45, %s37
      %s48 = ssub.s32 %s27, %s41
      %s49 = ssub.s32 %s46, %s47
      %s50 = sor.u32 %s48, %s49
      %p51 = scmp.eq.s32.totalorder %s50, 0
      %s53 = sadd.s32 %s52, 1
      %s54 = scalar_select %p51, %s52, %s53
      %p57 = pneg %p51
      %p58 = scmp.eq.s32.totalorder %s19, 5
      %p59 = por %p57, %p58
      %p60 = scmp.ne.s32.totalorder %s52, %s55
      %p61 = scmp.eq.s32.totalorder %s19, 0
      %p62 = por %p60, %p61
      %p63 = scmp.ne.s32.totalorder %s52, %s55
      %p64 = scmp.eq.s32.totalorder %s24, 5
      %p65 = por %p63, %p64
      %p66 = scmp.ne.s32.totalorder %s55, %s56
      %p67 = scmp.eq.s32.totalorder %s24, 0
      %p68 = por %p66, %p67
      %p69 = scmp.ne.s32.totalorder %s55, %s56
      %p70 = scmp.eq.s32.totalorder %s25, 5
      %p71 = por %p69, %p70
      %p73 = scmp.ne.s32.totalorder %s56, %s72
      %p74 = scmp.eq.s32.totalorder %s25, 0
      %p75 = por %p73, %p74
      %s76 = sadd.s32 %s26, %s28
      %s77 = sadd.s32 %s45, %s37
      %s78 = ssub.s32 %s27, %s41
      %s79 = ssub.s32 %s76, %s77
      %s80 = sor.u32 %s78, %s79
      %p81 = scmp.eq.s32.totalorder %s80, 0
      %s83 = sadd.s32 %s82, 1
      %s84 = scalar_select %p81, %s82, %s83
      %p87 = pneg %p81
      %p88 = scmp.eq.s32.totalorder %s19, 5
      %p89 = por %p87, %p88
      %p90 = scmp.ne.s32.totalorder %s82, %s85
      %p91 = scmp.eq.s32.totalorder %s19, 0
      %p92 = por %p90, %p91
      %p93 = scmp.ne.s32.totalorder %s82, %s85
      %p94 = scmp.eq.s32.totalorder %s24, 5
      %p95 = por %p93, %p94
      %p96 = scmp.ne.s32.totalorder %s85, %s86
      %p97 = scmp.eq.s32.totalorder %s24, 0
      %p98 = por %p96, %p97
      %p99 = scmp.ne.s32.totalorder %s85, %s86
      %p100 = scmp.eq.s32.totalorder %s25, 5
      %p101 = por %p99, %p100
      %p103 = scmp.ne.s32.totalorder %s86, %s102
      %p104 = scmp.eq.s32.totalorder %s25, 0
      %p105 = por %p103, %p104
      %s107 = sadd.s32 %s106, 1
      %p110 = scmp.eq.s32.totalorder %s19, 5
      %p111 = scmp.ne.s32.totalorder %s106, %s108
      %p112 = scmp.eq.s32.totalorder %s19, 0
      %p113 = por %p111, %p112
      %p114 = scmp.ne.s32.totalorder %s106, %s108
      %p115 = scmp.eq.s32.totalorder %s24, 5
      %p116 = por %p114, %p115
      %p117 = scmp.ne.s32.totalorder %s108, %s109
      %p118 = scmp.eq.s32.totalorder %s24, 0
      %p119 = por %p117, %p118
      %p120 = scmp.ne.s32.totalorder %s108, %s109
      %p121 = scmp.eq.s32.totalorder %s25, 5
      %p122 = por %p120, %p121
      %p124 = scmp.ne.s32.totalorder %s109, %s123
      %p125 = scmp.eq.s32.totalorder %s25, 0
      %p126 = por %p124, %p125
      %s127 = ssub.s32 %s26, %s45
      %p128 = scmp.eq.s32.totalorder %s127, 0
      %s130 = sadd.s32 %s129, 1
      %s131 = scalar_select %p128, %s129, %s130
      %p134 = pneg %p128
      %p135 = scmp.eq.s32.totalorder %s19, 5
      %p136 = por %p134, %p135
      %p137 = scmp.ne.s32.totalorder %s129, %s132
      %p138 = scmp.eq.s32.totalorder %s19, 0
      %p139 = por %p137, %p138
      %p140 = scmp.ne.s32.totalorder %s129, %s132
      %p141 = scmp.eq.s32.totalorder %s24, 5
      %p142 = por %p140, %p141
      %p143 = scmp.ne.s32.totalorder %s132, %s133
      %p144 = scmp.eq.s32.totalorder %s24, 0
      %p145 = por %p143, %p144
      %p146 = scmp.ne.s32.totalorder %s132, %s133
      %p147 = scmp.eq.s32.totalorder %s25, 5
      %p148 = por %p146, %p147
      %p150 = scmp.ne.s32.totalorder %s133, %s149
      %p151 = scmp.eq.s32.totalorder %s25, 0
      %p152 = por %p150, %p151
      %p153 = scmp.le.s32.totalorder 1, %s19
      %p154 = scmp.lt.s32.totalorder %s19, 7
      %p155 = pnand %p153, %p154
      %p156 = pneg %p155
      // Predicated region
      $region9: #{tpu_custom_call.1} parent=5 // pred_check
        _
      $region10: #{tpu_custom_call.1} parent=5 // pred_check_branch
        %158 = sbr.rel (%p155) target = $region12
      $region11: #{tpu_custom_call.1} parent=5 // pred_region
        %s159 = ssub.s32 %s19, 1
        // Predicated region
        $region13: #{tpu_custom_call.1} parent=11 // pred_check
          %p160 = pneg %p119
        $region14: #{tpu_custom_call.1} parent=11 // pred_check_branch
          %162 = sbr.rel (%p160) target = $region16
        $region15: #{tpu_custom_call.1} parent=11 // pred_region
          %164 = vsyncadd [#allocation9], 0
          %s166 = sshll.u32 %s2, 4
          %s167 = int_to_ptr.vmem [resolvable:$true] %s166
          %169 = dma.vmem_to_smem %s167, 16, [#allocation12], [#allocation9]
        $region16: #{tpu_custom_call.1} parent=11 // pred_fallthru
          _
      $region12: #{tpu_custom_call.1} parent=5 // pred_fallthru
        _
      %p170 = scmp.lt.s32.totalorder %s19, 6
      // Predicated region
      $region17: #{tpu_custom_call.1} parent=5 // pred_check
        %p171 = pneg %p170
      $region18: #{tpu_custom_call.1} parent=5 // pred_check_branch
        %173 = sbr.rel (%p171) target = $region20
      $region19: #{tpu_custom_call.1} parent=5 // pred_region
        // Predicated region
        $region21: #{tpu_custom_call.1} parent=19 // pred_check
          %p174 = pneg %p62
        $region22: #{tpu_custom_call.1} parent=19 // pred_check_branch
          %176 = sbr.rel (%p174) target = $region24
        $region23: #{tpu_custom_call.1} parent=19 // pred_region
          %s177 = sand.u32 %s52, 1
          %s178 = scalar_lea.sflag [#allocation7], %s177
          %s179 = sand.u32 %s52, 1
          %s180 = smul.addr %s179, 64
          %s181 = scalar_lea.vmem [#allocation6], %s180
          %s182 = sadd.s32 %s26, %s28
          %184 = vsyncadd %s178, 0
          %s185 = smul.addr %s27, 16
          %s186 = sadd.s32 %s182, %s185
          %s187 = smul.addr %s186, 8
          %s188 = scalar_lea.hbm %s0, %s187
          %s189 = sshll.u32 %s188, 4
          %s190 = int_to_ptr.hbm [resolvable:$true] %s189
          %s191 = sshll.u32 %s181, 4
          %s192 = int_to_ptr.vmem [resolvable:$true] %s191
          %197 = dma.hbm_to_vmem [thread:$0]  %s190, 1024, %s192, %s178, 256, 128, 8
        $region24: #{tpu_custom_call.1} parent=19 // pred_fallthru
          _
        // Predicated region
        $region25: #{tpu_custom_call.1} parent=19 // pred_check
          %p198 = pneg %p92
        $region26: #{tpu_custom_call.1} parent=19 // pred_check_branch
          %200 = sbr.rel (%p198) target = $region28
        $region27: #{tpu_custom_call.1} parent=19 // pred_region
          %s201 = sand.u32 %s82, 1
          %s202 = scalar_lea.sflag [#allocation11], %s201
          %s203 = sand.u32 %s82, 1
          %s204 = smul.addr %s203, 40
          %s205 = scalar_lea.vmem [#allocation10], %s204
          %s206 = sadd.s32 %s26, %s28
          %208 = vsyncadd %s202, 0
          %s209 = smul.addr %s27, 10
          %s210 = sadd.s32 %s206, %s209
          %s211 = smul.addr %s210, 8
          %s212 = scalar_lea.hbm %s1, %s211
          %s213 = sshll.u32 %s212, 4
          %s214 = int_to_ptr.hbm [resolvable:$true] %s213
          %s215 = sshll.u32 %s205, 4
          %s216 = int_to_ptr.vmem [resolvable:$true] %s215
          %221 = dma.hbm_to_vmem [thread:$0]  %s214, 640, %s216, %s202, 256, 128, 8
        $region28: #{tpu_custom_call.1} parent=19 // pred_fallthru
          _
      $region20: #{tpu_custom_call.1} parent=5 // pred_fallthru
        _
      %p222 = scmp.le.s32.totalorder 1, %s19
      %p223 = scmp.lt.s32.totalorder %s19, 7
      %p224 = pnand %p222, %p223
      %p225 = pneg %p224
      // Predicated region
      $region29: #{tpu_custom_call.1} parent=5 // pred_check
        _
      $region30: #{tpu_custom_call.1} parent=5 // pred_check_branch
        %227 = sbr.rel (%p224) target = $region32
      $region31: #{tpu_custom_call.1} parent=5 // pred_region
        %s228 = ssub.s32 %s19, 1
        %s229 = sand.u32 %s55, 1
        %s230 = scalar_lea.sflag [#allocation7], %s229
        %s231 = sand.u32 %s55, 1
        %s232 = smul.addr %s231, 64
        %s233 = scalar_lea.vmem [#allocation6], %s232
        // Predicated region
        $region33: #{tpu_custom_call.1} parent=31 // pred_check
          %p234 = pneg %p68
        $region34: #{tpu_custom_call.1} parent=31 // pred_check_branch
          %236 = sbr.rel (%p234) target = $region36
        $region35: #{tpu_custom_call.1} parent=31 // pred_region
          %238 = dma.done %s230, 1024
        $region36: #{tpu_custom_call.1} parent=31 // pred_fallthru
          _
        %s239 = sand.u32 %s85, 1
        %s240 = scalar_lea.sflag [#allocation11], %s239
        %s241 = sand.u32 %s85, 1
        %s242 = smul.addr %s241, 40
        %s243 = scalar_lea.vmem [#allocation10], %s242
        // Predicated region
        $region37: #{tpu_custom_call.1} parent=31 // pred_check
          %p244 = pneg %p98
        $region38: #{tpu_custom_call.1} parent=31 // pred_check_branch
          %246 = sbr.rel (%p244) target = $region40
        $region39: #{tpu_custom_call.1} parent=31 // pred_region
          %248 = dma.done %s240, 640
        $region40: #{tpu_custom_call.1} parent=31 // pred_fallthru
          _
        // Predicated region
        $region41: #{tpu_custom_call.1} parent=31 // pred_check
          %p249 = pneg %p119
        $region42: #{tpu_custom_call.1} parent=31 // pred_check_branch
          %251 = sbr.rel (%p249) target = $region44
        $region43: #{tpu_custom_call.1} parent=31 // pred_region
          %253 = dma.done [#allocation9], 16
        $region44: #{tpu_custom_call.1} parent=31 // pred_fallthru
          _
        %254 = sfence
        %s255 = sand.u32 %s55, 1
        %s256 = scalar_lea.sflag [#allocation7], %s255
        %s257 = sand.u32 %s55, 1
        %s258 = smul.addr %s257, 64
        %s259 = scalar_lea.vmem [#allocation6], %s258
        %p260 = pneg %p68
        %p261 = pneg %p65
        %s262 = sand.u32 %s85, 1
        %s263 = scalar_lea.sflag [#allocation11], %s262
        %s264 = sand.u32 %s85, 1
        %s265 = smul.addr %s264, 40
        %s266 = scalar_lea.vmem [#allocation10], %s265
        %p267 = pneg %p98
        %p268 = pneg %p95
        %p269 = pneg %p119
        %p270 = pneg %p116
        %p271 = pneg %p145
        %p272 = pneg %p142
        %s273 = sand.u32 %s132, 1
        %s274 = scalar_lea.sflag [#allocation8], %s273
        %s275 = sand.u32 %s132, 1
        %s276 = smul.addr %s275, 32
        %s277 = scalar_lea.vmem [#allocation13], %s276
        %s278 = sadd.s32 %s29, %s31
        %s279 = sadd.s32 %s29, %s31
        %p280 = scmp.eq.s32.totalorder %s30, 0
        %p281 = scmp.eq.s32.totalorder %s31, 0
        %p282 = pnand %p280, %p281
        %p283 = pneg %p282
        // Predicated region
        $region45: #{tpu_custom_call.1} parent=31 // pred_check
          _
        $region46: #{tpu_custom_call.1} parent=31 // pred_check_branch
          %285 = sbr.rel (%p282) target = $region48
        $region47: #{tpu_custom_call.1} parent=31 // pred_region
          %286 = vst [vmem:[#allocation2] sm:$0xff] 0.0
          %287 = vst [vmem:[#allocation3] sm:$0xff] 0.0
          %288 = vst [vmem:[#allocation4] sm:$0xff] 0.0
          %289 = vst [vmem:[#allocation5] sm:$0xff] 0.0
        $region48: #{tpu_custom_call.1} parent=31 // pred_fallthru
          _
        %s290 = sld [smem:[#allocation12 + %s30]]
        %v291 = vld [vmem:[%s243] sm:$0xff]
        %s292 = scalar_lea.vmem %s243, 8 [#allocation10]
        %v293 = vld [vmem:[%s292] sm:$0xff]
        %s294 = scalar_lea.vmem %s243, 16 [#allocation10]
        %v295 = vld [vmem:[%s294] sm:$0xff]
        %s296 = scalar_lea.vmem %s243, 24 [#allocation10]
        %v297 = vld [vmem:[%s296] sm:$0xff]
        %s298 = scalar_lea.vmem %s243, 32 [#allocation10]
        %v299 = vld [vmem:[%s298] sm:$0xff]
        %vm300 = vcmp.eq.f32.partialorder %v291, 1.0
        %vm301 = vcmp.eq.f32.partialorder %v291, 0.0
        %v302 = vld [vmem:[%s233] sm:$0xff]
        %s303 = scalar_lea.vmem %s233, 8 [#allocation6]
        %v304 = vld [vmem:[%s303] sm:$0xff]
        %s305 = scalar_lea.vmem %s233, 16 [#allocation6]
        %v306 = vld [vmem:[%s305] sm:$0xff]
        %v307 = vand.u32 2147483647, %v302
        %v308 = vsub.f32 0.0, %v307
        %v309 = vmul.f32 %v308, 1.442695
        %v310 = vpow.pop %v309
        %v311 = vadd.f32 %v310, 1.0
        %v312 = vrcp.pop %v311
        %vm313 = vcmp.ge.f32.partialorder %v302, 0.0
        %v314 = vmul.f32 %v310, %v312
        %v315 = vsel %vm313, %v312, %v314
        %v316 = vmax.f32 %v302, 0.0
        %v317 = vmul.f32 %v302, %v291
        %v318 = vsub.f32 %v316, %v317
        %v319 = vadd.f32 %v310, 1.0
        %v320 = vlog2.pop %v319
        %v321 = vmul.f32 %v320, 0.6931472
        %v322 = vmul.f32 -0.5, %v310
        %v323 = vadd.f32 %v322, 1.0
        %v324 = vmul.f32 %v323, %v310
        %v325 = vand.u32 2147483647, %v310
        %vm326 = vcmp.lt.f32.partialorder %v325, 0.0004427343
        %v327 = vsel %vm326, %v324, %v321
        %v328 = vadd.f32 %v318, %v327
        %v329 = vand.u32 2147483647, %v304
        %v330 = vsub.f32 0.0, %v329
        %v331 = vmul.f32 %v330, 1.442695
        %v332 = vpow.pop %v331
        %v333 = vadd.f32 %v332, 1.0
        %v334 = vrcp.pop %v333
        %vm335 = vcmp.ge.f32.partialorder %v304, 0.0
        %v336 = vmul.f32 %v332, %v334
        %v337 = vsel %vm335, %v334, %v336
        %v338 = vstv %s290
        %v339 = vmul.f32 %v306, %v338
        %v340 = vmul.f32 %v339, 1.442695
        %v341 = vpow.pop %v340
        %v342 = vmul.f32 %v341, 0.5
        %v343 = vadd.f32 %v337, %v342
        %v344 = vmul.f32 %v295, 0.5
        %v345 = vadd.f32 %v293, %v344
        %v346 = vmin.f32 %v343, %v345
        %v347 = vsub.f32 %v337, %v342
        %v348 = vsub.f32 %v293, %v344
        %v349 = vmax.f32 %v347, %v348
        %v350 = vsub.f32 %v346, %v349
        %v351 = vmax.f32 %v350, 0.0
        %v352 = vadd.f32 %v341, %v295
        %v353 = vsub.f32 %v352, %v351
        %v354 = vadd.f32 %v353, 1e-06
        %v355 = vrcp.pop %v354
        %v356 = vmul.f32 %v351, %v355
        %v357 = vmul.f32 %v356, %v291
        %v358 = vsub.f32 %v315, %v357
        %v359 = vmul.f32 %v358, %v358
        %v360 = vsub.f32 %v337, %v293
        %v361 = vmul.f32 %v360, %v360
        %v362 = vsub.f32 %v306, %v299
        %v363 = vmul.f32 %v362, %v362
        %v364 = vadd.f32 %v361, %v363
        %v365 = vmul.f32 %v364, 5.0
        %v366 = vadd.f32 %v359, %v365
        %s367 = scalar_lea.vmem %s233, 24 [#allocation6]
        %v368 = vld [vmem:[%s367] sm:$0xff]
        %s369 = scalar_lea.vmem %s233, 32 [#allocation6]
        %v370 = vld [vmem:[%s369] sm:$0xff]
        %v371 = vmax.f32 %v368, %v370
        %s372 = scalar_lea.vmem %s233, 40 [#allocation6]
        %v373 = vld [vmem:[%s372] sm:$0xff]
        %v374 = vmax.f32 %v371, %v373
        %s375 = scalar_lea.vmem %s233, 48 [#allocation6]
        %v376 = vld [vmem:[%s375] sm:$0xff]
        %v377 = vmax.f32 %v374, %v376
        %s378 = scalar_lea.vmem %s233, 56 [#allocation6]
        %v379 = vld [vmem:[%s378] sm:$0xff]
        %v380 = vmax.f32 %v377, %v379
        %v381 = vsub.f32 %v368, %v380
        %v382 = vmul.f32 %v381, 1.442695
        %v383 = vpow.pop %v382
        %v384 = vadd.f32 %v383, 0.0
        %vm385 = vcmp.eq.f32.partialorder %v297, 0.0
        %v386 = vsel %vm385, %v368, 0.0
        %v387 = vadd.f32 %v386, 0.0
        %v388 = vsub.f32 %v370, %v380
        %v389 = vmul.f32 %v388, 1.442695
        %v390 = vpow.pop %v389
        %v391 = vadd.f32 %v384, %v390
        %vm392 = vcmp.eq.f32.partialorder %v297, 1.0
        %v393 = vsel %vm392, %v370, 0.0
        %v394 = vadd.f32 %v387, %v393
        %v395 = vsub.f32 %v373, %v380
        %v396 = vmul.f32 %v395, 1.442695
        %v397 = vpow.pop %v396
        %v398 = vadd.f32 %v391, %v397
        %vm399 = vcmp.eq.f32.partialorder %v297, 2.0
        %v400 = vsel %vm399, %v373, 0.0
        %v401 = vadd.f32 %v394, %v400
        %v402 = vsub.f32 %v376, %v380
        %v403 = vmul.f32 %v402, 1.442695
        %v404 = vpow.pop %v403
        %v405 = vadd.f32 %v398, %v404
        %vm406 = vcmp.eq.f32.partialorder %v297, 3.0
        %v407 = vsel %vm406, %v376, 0.0
        %v408 = vadd.f32 %v401, %v407
        %v409 = vsub.f32 %v379, %v380
        %v410 = vmul.f32 %v409, 1.442695
        %v411 = vpow.pop %v410
        %v412 = vadd.f32 %v405, %v411
        %vm413 = vcmp.eq.f32.partialorder %v297, 4.0
        %v414 = vsel %vm413, %v379, 0.0
        %v415 = vadd.f32 %v408, %v414
        %v416 = vsub.f32 %v380, %v415
        %v417 = vadd.f32 %v366, %v416
        %v418 = vlog2.pop %v412
        %v419 = vmul.f32 %v418, 0.6931472
        %v420 = vadd.f32 %v417, %v419
        %v421 = vld [vmem:[#allocation2] sm:$0xff]
        %v422 = vsel %vm300, %v420, 0.0
        %v423 = vadd.f32 %v422, 0.0
        %v424 = vadd.f32 %v421, %v423
        %425 = vst [vmem:[#allocation2] sm:$0xff] %v424
        %v426 = vld [vmem:[#allocation3] sm:$0xff]
        %v427 = vsel %vm300, 1, 0
        %v428 = vcvt.s32.f32 %v427
        %v429 = vadd.f32 %v428, 0.0
        %v430 = vadd.f32 %v426, %v429
        %431 = vst [vmem:[#allocation3] sm:$0xff] %v430
        %v432 = vld [vmem:[#allocation4] sm:$0xff]
        %v433 = vsel %vm301, %v328, 0.0
        %v434 = vadd.f32 %v433, 0.0
        %v435 = vadd.f32 %v432, %v434
        %436 = vst [vmem:[#allocation4] sm:$0xff] %v435
        %v437 = vld [vmem:[#allocation5] sm:$0xff]
        %v438 = vsel %vm301, 1, 0
        %v439 = vcvt.s32.f32 %v438
        %v440 = vadd.f32 %v439, 0.0
        %v441 = vadd.f32 %v437, %v440
        %442 = vst [vmem:[#allocation5] sm:$0xff] %v441
        %p443 = scmp.eq.s32.totalorder %s30, 2
        %p444 = pnand %p443, %p281
        %p445 = pneg %p444
        // Predicated region
        $region49: #{tpu_custom_call.1} parent=31 // pred_check
          _
        $region50: #{tpu_custom_call.1} parent=31 // pred_check_branch
          %447 = sbr.rel (%p444) target = $region52
        $region51: #{tpu_custom_call.1} parent=31 // pred_region
          %v448 = vld [vmem:[#allocation2] sm:$0xff]
          %449 = vst [vmem:[%s277] sm:$0xff] %v448
          %v450 = vld [vmem:[#allocation3] sm:$0xff]
          %s451 = scalar_lea.vmem %s277, 8 [#allocation13]
          %452 = vst [vmem:[%s451] sm:$0xff] %v450
          %v453 = vld [vmem:[#allocation4] sm:$0xff]
          %s454 = scalar_lea.vmem %s277, 16 [#allocation13]
          %455 = vst [vmem:[%s454] sm:$0xff] %v453
          %v456 = vld [vmem:[#allocation5] sm:$0xff]
          %s457 = scalar_lea.vmem %s277, 24 [#allocation13]
          %458 = vst [vmem:[%s457] sm:$0xff] %v456
        $region52: #{tpu_custom_call.1} parent=31 // pred_fallthru
          _
        %s459 = sand.u32 %s132, 1
        %s460 = scalar_lea.sflag [#allocation8], %s459
        %s461 = sand.u32 %s132, 1
        %s462 = smul.addr %s461, 32
        %s463 = scalar_lea.vmem [#allocation13], %s462
        // Predicated region
        $region53: #{tpu_custom_call.1} parent=31 // pred_check
          %p464 = pneg %p142
        $region54: #{tpu_custom_call.1} parent=31 // pred_check_branch
          %466 = sbr.rel (%p464) target = $region56
        $region55: #{tpu_custom_call.1} parent=31 // pred_region
          %468 = vsyncadd %s460, 0
          %s469 = smul.addr %s29, 4
          %s470 = smul.addr %s469, 8
          %s471 = scalar_lea.hbm %s3, %s470
          %s472 = sshll.u32 %s463, 4
          %s473 = int_to_ptr.vmem [resolvable:$true] %s472
          %s474 = sshll.u32 %s471, 4
          %s475 = int_to_ptr.hbm [resolvable:$true] %s474
          %480 = dma.vmem_to_hbm [thread:$0]  %s473, 512, %s475, %s460, 128, 128, 8
        $region56: #{tpu_custom_call.1} parent=31 // pred_fallthru
          _
      $region32: #{tpu_custom_call.1} parent=5 // pred_fallthru
        _
      %p481 = scmp.le.s32.totalorder 2, %s19
      // Predicated region
      $region57: #{tpu_custom_call.1} parent=5 // pred_check
        %p482 = pneg %p481
      $region58: #{tpu_custom_call.1} parent=5 // pred_check_branch
        %484 = sbr.rel (%p482) target = $region60
      $region59: #{tpu_custom_call.1} parent=5 // pred_region
        %s485 = ssub.s32 %s19, 2
        // Predicated region
        $region61: #{tpu_custom_call.1} parent=59 // pred_check
          %p486 = pneg %p148
        $region62: #{tpu_custom_call.1} parent=59 // pred_check_branch
          %488 = sbr.rel (%p486) target = $region64
        $region63: #{tpu_custom_call.1} parent=59 // pred_region
          %s489 = sand.u32 %s133, 1
          %s490 = scalar_lea.sflag [#allocation8], %s489
          %s491 = sand.u32 %s133, 1
          %s492 = smul.addr %s491, 32
          %s493 = scalar_lea.vmem [#allocation13], %s492
          %495 = dma.done %s490, 512
        $region64: #{tpu_custom_call.1} parent=59 // pred_fallthru
          _
      $region60: #{tpu_custom_call.1} parent=5 // pred_fallthru
        _
    $region6: #{tpu_custom_call.1} parent=1 // loop_footer
      %s23 = sadd.s32 1, %s19
    $region7: #{tpu_custom_call.1} parent=1 // loop_footer_branch
      %18 = sbr.rel target = $region3
    $region8: #{tpu_custom_call.1} parent=1 // loop_exit
      _
    %496 = vsyncpa [#allocation7], 1
    %s497 = scalar_lea.sflag [#allocation7], 1
    %498 = vsyncpa %s497, 1
    %499 = vsyncpa [#allocation11], 1
    %s500 = scalar_lea.sflag [#allocation11], 1
    %501 = vsyncpa %s500, 1
    %502 = vsyncpa [#allocation8], 1
    %s503 = scalar_lea.sflag [#allocation8], 1
    %504 = vsyncpa %s503, 1
    %505 = vsyncpa [#allocation9], 1
    %s506 = scalar_lea.sflag [#allocation9], 1
    %507 = vsyncpa %s506, 1

</llo_original>
